<compile_context>
chip_gen: v7x
topology: tpu7x:2x2x1
jax: 0.10.0
libtpu: 0.0.40
codegen_flags: <defaults>
</compile_context>

<pallas_src>
import math

import jax
import jax.numpy as jnp
from jax.experimental import pallas as pl
from jax.experimental.pallas import tpu as pltpu


# ---------------------------------------------------------------------------
# Kernel
# ---------------------------------------------------------------------------
def _ffn_kernel(x_ref, w1_ref, b1_ref, w2_ref, b2_ref, o_ref, acc_ref):
    """One (m-tile, ff-chunk) grid step of  y = relu(x@W1 + b1) @ W2 + b2.

    x_ref  : [TM, d_model]        (compute dtype)
    w1_ref : [d_model, TFF]       (compute dtype)
    b1_ref : [1, TFF]             (f32, pre-cast)
    w2_ref : [TFF, d_model]       (compute dtype)
    b2_ref : [1, d_model]         (f32, pre-cast)
    o_ref  : [TM, d_model]        (output dtype)
    acc_ref: [TM, d_model] f32 VMEM scratch, persists across the ff axis.
    """
    ff = pl.program_id(1)

    @pl.when(ff == 0)
    def _init():
        acc_ref[...] = jnp.zeros_like(acc_ref)

    # Linear1 chunk + bias + ReLU: MXU with f32 accumulation, bias/ReLU on VPU.
    h = jnp.dot(x_ref[...], w1_ref[...], preferred_element_type=jnp.float32)
    h = jnp.maximum(h + b1_ref[...], 0.0)

    # Partial Linear2: accumulate this chunk's contribution into f32 scratch.
    h = h.astype(w2_ref.dtype)
    acc_ref[...] += jnp.dot(h, w2_ref[...], preferred_element_type=jnp.float32)

    @pl.when(ff == pl.num_programs(1) - 1)
    def _finalize():
        o_ref[...] = (acc_ref[...] + b2_ref[...]).astype(o_ref.dtype)


# ---------------------------------------------------------------------------
# Parameter prep (one-time; NOT in the hot forward path)
# ---------------------------------------------------------------------------
def prepare_ffn_params(w1_pt, b1, w2_pt, b2, dtype=jnp.bfloat16):
    """Convert PyTorch nn.Linear layouts to kernel layouts.

    w1_pt: [d_ff, d_model]  -> stored as [d_model, d_ff]  (compute dtype)
    w2_pt: [d_model, d_ff]  -> stored as [d_ff, d_model]  (compute dtype)
    b1/b2 kept in f32 (kernel adds them directly, no per-step casts).
    """
    d_ff, d_model = w1_pt.shape
    w1_t = jnp.asarray(w1_pt, dtype).T                  # [d_model, d_ff]
    w2_t = jnp.asarray(w2_pt, dtype).T                  # [d_ff, d_model]
    b1_2d = jnp.asarray(b1, jnp.float32).reshape(1, d_ff)
    b2_2d = jnp.asarray(b2, jnp.float32).reshape(1, d_model)
    return w1_t, b1_2d, w2_t, b2_2d


# ---------------------------------------------------------------------------
# Tiling helpers
# ---------------------------------------------------------------------------
def _round_up(x, m):
    return ((x + m - 1) // m) * m


def _pick_ff_tile(d_ff, block_ff):
    """Largest multiple of 128 that divides d_ff and is <= block_ff, else d_ff."""
    if d_ff <= block_ff:
        return d_ff
    t = (block_ff // 128) * 128
    while t >= 128:
        if d_ff % t == 0:
            return t
        t -= 128
    return d_ff  # no clean 128-multiple divisor: keep full d_ff in one chunk


# ---------------------------------------------------------------------------
# Forward wrapper
# ---------------------------------------------------------------------------
def feed_forward_block_forward(x, w1_t, b1_2d, w2_t, b2_2d, *,
                               block_m=512, block_ff=512):
    """Fused FFN forward (eval mode: dropout == identity).

    x: [..., d_model]; returns [..., d_model] in x.dtype.
    """
    *lead, d_model = x.shape
    d_ff = w1_t.shape[1]
    compute_dtype = w1_t.dtype
    out_dtype = x.dtype

    m = int(math.prod(lead)) if lead else 1
    x2d = x.reshape(m, d_model).astype(compute_dtype)

    # --- Token-axis tiling: multiple of 8, padded (no ragged edge tile),
    #     split into >=2 tiles when there is enough work (v7x megacore).
    if m <= block_m:
        tm = _round_up(pl.cdiv(m, 2), 8) if m >= 512 else _round_up(m, 8)
    else:
        tm = block_m
    m_pad = _round_up(m, tm)
    if m_pad != m:
        x2d = jnp.pad(x2d, ((0, m_pad - m), (0, 0)))
    num_m = m_pad // tm

    # --- d_ff (reduction) tiling: innermost "arbitrary" axis.
    tff = _pick_ff_tile(d_ff, block_ff)
    num_ff = d_ff // tff

    # --- VMEM budget from the actual tile footprint (stay under v7x's 64 MiB/TC).
    w_bytes = jnp.dtype(compute_dtype).itemsize
    o_bytes = jnp.dtype(out_dtype).itemsize
    vmem_needed = (
        2 * tm * d_model * w_bytes          # x tile (double-buffered)
        + 2 * tm * d_model * o_bytes        # out tile (double-buffered)
        + 2 * d_model * tff * w_bytes       # w1 chunk (double-buffered)
        + 2 * tff * d_model * w_bytes       # w2 chunk (double-buffered)
        + 2 * 8 * tff * 4                   # b1 chunk (sublane-padded, f32)
        + 2 * 8 * d_model * 4               # b2 (f32)
        + tm * d_model * 4                  # f32 accumulator scratch
        + tm * tff * (4 + w_bytes)          # h intermediate (+ cast copy)
    )
    vmem_limit = max(32 << 20, min(int(vmem_needed * 1.5) + (2 << 20), 48 << 20))

    cost = pl.CostEstimate(
        flops=2 * 2 * m_pad * d_model * d_ff,                        # two matmuls
        transcendentals=0,
        bytes_accessed=(m_pad * d_model * (w_bytes + o_bytes)        # x in, y out
                        + num_m * 2 * d_model * d_ff * w_bytes       # W1+W2 per m tile
                        + 4 * (d_ff + d_model)),                     # biases (f32)
    )

    out2d = pl.pallas_call(
        _ffn_kernel,
        out_shape=jax.ShapeDtypeStruct((m_pad, d_model), out_dtype),
        grid_spec=pltpu.PrefetchScalarGridSpec(
            num_scalar_prefetch=0,
            grid=(num_m, num_ff),
            in_specs=[
                pl.BlockSpec((tm, d_model), lambda i, f: (i, 0)),    # x tile
                pl.BlockSpec((d_model, tff), lambda i, f: (0, f)),   # W1 chunk
                pl.BlockSpec((1, tff), lambda i, f: (0, f)),         # b1 chunk (f32)
                pl.BlockSpec((tff, d_model), lambda i, f: (f, 0)),   # W2 chunk
                pl.BlockSpec((1, d_model), lambda i, f: (0, 0)),     # b2 (f32)
            ],
            out_specs=pl.BlockSpec((tm, d_model), lambda i, f: (i, 0)),
            scratch_shapes=[pltpu.VMEM((tm, d_model), jnp.float32)],
        ),
        compiler_params=pltpu.CompilerParams(
            dimension_semantics=("parallel", "arbitrary"),
            vmem_limit_bytes=vmem_limit,
        ),
        cost_estimate=cost,
    )(x2d, w1_t, b1_2d, w2_t, b2_2d)

    if m_pad != m:
        out2d = out2d[:m]
    return out2d.reshape(*lead, d_model)


# ---------------------------------------------------------------------------
# Demo / correctness check
# ---------------------------------------------------------------------------
if __name__ == "__main__":
    # Small but MXU/lane-friendly shapes; d_ff=1024 with block_ff=512 exercises
    # the tiled-reduction / accumulator path (num_ff = 2).
    batch, seq, d_model, d_ff = 2, 8, 128, 1024

    key = jax.random.PRNGKey(0)
    kx, kw1, kb1, kw2, kb2 = jax.random.split(key, 5)

    x = jax.random.normal(kx, (batch, seq, d_model), dtype=jnp.float32)

    # nn.Linear-style init: U(-1/sqrt(fan_in), 1/sqrt(fan_in)), PyTorch layouts.
    bound1 = 1.0 / math.sqrt(d_model)
    w1_pt = jax.random.uniform(kw1, (d_ff, d_model),
                               minval=-bound1, maxval=bound1, dtype=jnp.float32)
    b1 = jax.random.uniform(kb1, (d_ff,),
                            minval=-bound1, maxval=bound1, dtype=jnp.float32)
    bound2 = 1.0 / math.sqrt(d_ff)
    w2_pt = jax.random.uniform(kw2, (d_model, d_ff),
                               minval=-bound2, maxval=bound2, dtype=jnp.float32)
    b2 = jax.random.uniform(kb2, (d_model,),
                            minval=-bound2, maxval=bound2, dtype=jnp.float32)

    # Reference (eval-mode FFN: dropout == identity), f32.
    h_ref = jnp.maximum(x.reshape(-1, d_model) @ w1_pt.T + b1, 0.0)
    ref = (h_ref @ w2_pt.T + b2).reshape(batch, seq, d_model)

    # --- 1) f32 compute path: tight tolerance against the f32 reference.
    params_f32 = prepare_ffn_params(w1_pt, b1, w2_pt, b2, dtype=jnp.float32)
    out_f32 = feed_forward_block_forward(x, *params_f32, block_ff=512)
    out_f32 = jax.block_until_ready(out_f32)
    assert out_f32.shape == (batch, seq, d_model)
    assert jnp.allclose(out_f32, ref, atol=1e-3, rtol=1e-3), (
        float(jnp.max(jnp.abs(out_f32 - ref))))

    # --- 2) bf16 compute path (recommended for perf: MXU is bf16-native on
    #        v5e/v6e/v7x); looser tolerance covers expected quantization error.
    params_bf16 = prepare_ffn_params(w1_pt, b1, w2_pt, b2, dtype=jnp.bfloat16)
    out_bf16 = feed_forward_block_forward(x, *params_bf16, block_ff=512)
    out_bf16 = jax.block_until_ready(out_bf16)
    assert out_bf16.shape == (batch, seq, d_model)
    assert jnp.allclose(out_bf16.astype(jnp.float32), ref, atol=5e-2, rtol=5e-2), (
        float(jnp.max(jnp.abs(out_bf16.astype(jnp.float32) - ref))))

    print("KERNEL_OK")
</pallas_src>

<mosaic_0001>
module attributes {stable_mosaic.version = 11 : i64} {
  func.func @_ffn_kernel(%arg0: i32, %arg1: i32, %arg2: memref<16x128xf32, #tpu.memory_space<vmem>>, %arg3: memref<128x512xf32, #tpu.memory_space<vmem>>, %arg4: memref<1x512xf32, #tpu.memory_space<vmem>>, %arg5: memref<512x128xf32, #tpu.memory_space<vmem>>, %arg6: memref<1x128xf32, #tpu.memory_space<vmem>>, %arg7: memref<16x128xf32, #tpu.memory_space<vmem>>, %arg8: memref<16x128xf32, #tpu.memory_space<vmem>>) attributes {dimension_semantics = [#tpu.dimension_semantics<parallel>, #tpu.dimension_semantics<arbitrary>], iteration_bounds = array<i64: 1, 2>, scalar_prefetch = 0 : i64, scratch_operands = 1 : i64, tpu.core_type = #tpu.core_type<tc>, window_params = [{transform_indices = @transform_0, window_bounds = array<i64: 16, 128>}, {transform_indices = @transform_1, window_bounds = array<i64: 128, 512>}, {transform_indices = @transform_2, window_bounds = array<i64: 1, 512>}, {transform_indices = @transform_3, window_bounds = array<i64: 512, 128>}, {pipeline_mode = #tpu.pipeline_mode<synchronous>, transform_indices = @transform_4, window_bounds = array<i64: 1, 128>}, {transform_indices = @transform_5, window_bounds = array<i64: 16, 128>}]} {
    %c0_i32 = arith.constant 0 : i32
    %0 = arith.cmpi eq, %arg1, %c0_i32 : i32
    %1 = arith.extui %0 : i1 to i32
    %c0_i32_0 = arith.constant 0 : i32
    %2 = arith.cmpi ne, %1, %c0_i32_0 : i32
    scf.if %2 {
      %cst_15 = arith.constant 0.000000e+00 : f32
      %19 = vector.broadcast %cst_15 : f32 to vector<16x128xf32>
      %c0_16 = arith.constant 0 : index
      %c0_17 = arith.constant 0 : index
      %20 = vector.load %arg8[%c0_16, %c0_17] : memref<16x128xf32, #tpu.memory_space<vmem>>, vector<16x128xf32>
      tpu.vector_store %arg8[%c0_16, %c0_17], %19 {strides = array<i32>} : memref<16x128xf32, #tpu.memory_space<vmem>>, vector<16x128xf32>,
    } else {
    }
    %c0 = arith.constant 0 : index
    %c0_1 = arith.constant 0 : index
    %3 = vector.load %arg2[%c0, %c0_1] : memref<16x128xf32, #tpu.memory_space<vmem>>, vector<16x128xf32>
    %c0_2 = arith.constant 0 : index
    %c0_3 = arith.constant 0 : index
    %4 = vector.load %arg3[%c0_2, %c0_3] : memref<128x512xf32, #tpu.memory_space<vmem>>, vector<128x512xf32>
    %cst = arith.constant dense<0.000000e+00> : vector<16x512xf32>
    %5 = tpu.matmul %3, %4, %cst {dimension_numbers = #tpu.dot_dimension_numbers<[1], [0], [0], [1], [0, 0, 1, 1], [], []>} : vector<16x128xf32>, vector<128x512xf32>, vector<16x512xf32> -> vector<16x512xf32>
    %c0_4 = arith.constant 0 : index
    %c0_5 = arith.constant 0 : index
    %6 = vector.load %arg4[%c0_4, %c0_5] : memref<1x512xf32, #tpu.memory_space<vmem>>, vector<1x512xf32>
    %7 = vector.broadcast %6 : vector<1x512xf32> to vector<16x512xf32>
    %8 = arith.addf %5, %7 : vector<16x512xf32>
    %cst_6 = arith.constant 0.000000e+00 : f32
    %9 = vector.broadcast %cst_6 : f32 to vector<16x512xf32>
    %10 = arith.maximumf %8, %9 : vector<16x512xf32>
    %c0_7 = arith.constant 0 : index
    %c0_8 = arith.constant 0 : index
    %11 = vector.load %arg8[%c0_7, %c0_8] : memref<16x128xf32, #tpu.memory_space<vmem>>, vector<16x128xf32>
    %c0_9 = arith.constant 0 : index
    %c0_10 = arith.constant 0 : index
    %12 = vector.load %arg5[%c0_9, %c0_10] : memref<512x128xf32, #tpu.memory_space<vmem>>, vector<512x128xf32>
    %cst_11 = arith.constant dense<0.000000e+00> : vector<16x128xf32>
    %13 = tpu.matmul %10, %12, %cst_11 {dimension_numbers = #tpu.dot_dimension_numbers<[1], [0], [0], [1], [0, 0, 1, 1], [], []>} : vector<16x512xf32>, vector<512x128xf32>, vector<16x128xf32> -> vector<16x128xf32>
    %14 = arith.addf %11, %13 : vector<16x128xf32>
    %c0_12 = arith.constant 0 : index
    %c0_13 = arith.constant 0 : index
    %15 = vector.load %arg8[%c0_12, %c0_13] : memref<16x128xf32, #tpu.memory_space<vmem>>, vector<16x128xf32>
    tpu.vector_store %arg8[%c0_12, %c0_13], %14 {strides = array<i32>} : memref<16x128xf32, #tpu.memory_space<vmem>>, vector<16x128xf32>,
    %c1_i32 = arith.constant 1 : i32
    %16 = arith.cmpi eq, %arg1, %c1_i32 : i32
    %17 = arith.extui %16 : i1 to i32
    %c0_i32_14 = arith.constant 0 : i32
    %18 = arith.cmpi ne, %17, %c0_i32_14 : i32
    scf.if %18 {
      %c0_15 = arith.constant 0 : index
      %c0_16 = arith.constant 0 : index
      %19 = vector.load %arg8[%c0_15, %c0_16] : memref<16x128xf32, #tpu.memory_space<vmem>>, vector<16x128xf32>
      %c0_17 = arith.constant 0 : index
      %c0_18 = arith.constant 0 : index
      %20 = vector.load %arg6[%c0_17, %c0_18] : memref<1x128xf32, #tpu.memory_space<vmem>>, vector<1x128xf32>
      %21 = vector.broadcast %20 : vector<1x128xf32> to vector<16x128xf32>
      %22 = arith.addf %19, %21 : vector<16x128xf32>
      %c0_19 = arith.constant 0 : index
      %c0_20 = arith.constant 0 : index
      %23 = vector.load %arg7[%c0_19, %c0_20] : memref<16x128xf32, #tpu.memory_space<vmem>>, vector<16x128xf32>
      tpu.vector_store %arg7[%c0_19, %c0_20], %22 {strides = array<i32>} : memref<16x128xf32, #tpu.memory_space<vmem>>, vector<16x128xf32>,
    } else {
    }
    return
  }
  func.func @transform_0(%arg0: i32, %arg1: i32) -> (i32, i32) {
    %c0_i32 = arith.constant 0 : i32
    %c0_i32_0 = arith.constant 0 : i32
    return %arg0, %c0_i32 : i32, i32
  }
  func.func @transform_1(%arg0: i32, %arg1: i32) -> (i32, i32) {
    %c0_i32 = arith.constant 0 : i32
    %c0_i32_0 = arith.constant 0 : i32
    return %c0_i32, %arg1 : i32, i32
  }
  func.func @transform_2(%arg0: i32, %arg1: i32) -> (i32, i32) {
    %c0_i32 = arith.constant 0 : i32
    %c0_i32_0 = arith.constant 0 : i32
    return %c0_i32, %arg1 : i32, i32
  }
  func.func @transform_3(%arg0: i32, %arg1: i32) -> (i32, i32) {
    %c0_i32 = arith.constant 0 : i32
    %c0_i32_0 = arith.constant 0 : i32
    return %arg1, %c0_i32 : i32, i32
  }
  func.func @transform_4(%arg0: i32, %arg1: i32) -> (i32, i32) {
    %c0_i32 = arith.constant 0 : i32
    %c0_i32_0 = arith.constant 0 : i32
    %c0_i32_1 = arith.constant 0 : i32
    return %c0_i32, %c0_i32_0 : i32, i32
  }
  func.func @transform_5(%arg0: i32, %arg1: i32) -> (i32, i32) {
    %c0_i32 = arith.constant 0 : i32
    %c0_i32_0 = arith.constant 0 : i32
    return %arg0, %c0_i32 : i32, i32
  }
}

</mosaic_0001>

<llo_original>
// kernel: tpu_custom_call.1
$region0: #{tpu_custom_call.1}
  #allocation0 [shape = 'u32[]', space=smem, size = 0x4, offset = 0x4, fixed_abs, tag = 'smem constant byte address 0x4 - core index']
  #allocation1 [shape = 'u32[144,128]{1,0:T(1,128)}', space=vmem, size = 0x12000, scoped, tag = 'internal scratch']
  #allocation2 [shape = 'f32[16,128]{1,0:T(8,128)}', space=vmem, size = 0x2000, scoped, tag = 'scratch operand']
  %s0 = inlined_call_operand.hbm [shape: f32[16,128], index: 0, kind: input, shape index: {}]
  %s1 = inlined_call_operand.hbm [shape: f32[128,1024], index: 1, kind: input, shape index: {}]
  %s2 = inlined_call_operand.hbm [shape: f32[1,1024], index: 2, kind: input, shape index: {}]
  %s3 = inlined_call_operand.hbm [shape: f32[1024,128], index: 3, kind: input, shape index: {}]
  %s4 = inlined_call_operand.vmem [shape: f32[1,128], index: 4, kind: input, shape index: {}]
  %s5 = inlined_call_operand.hbm [shape: f32[16,128], index: 5, kind: output, shape index: {}]
  %s6 = sld [smem:[#allocation0]]
  $region77: #{tpu_custom_call.1} parent=0
    _
  %s8 = ssub.s32 1, %s6
  %s9 = scalar_select 0, %s8, %s6
  $region1: #{tpu_custom_call.1} parent=0
    #allocation3 [shape = 'u8[8192]{0}', space=vmem, size = 0x2000, scoped, tag = 'input window, operand 0, single buffered']
    #allocation4 [shape = 's32[2]{0}', space=sflag, size = 0x8, scoped, tag = 'scoped memory for tpu_custom_call.1']
    #allocation5 [shape = 's32[2]{0}', space=sflag, size = 0x8, scoped, tag = 'scoped memory for tpu_custom_call.1']
    #allocation6 [shape = 'u8[524288]{0}', space=vmem, size = 0x80000, scoped, tag = 'input window, operand 1']
    #allocation7 [shape = 's32[2]{0}', space=sflag, size = 0x8, scoped, tag = 'scoped memory for tpu_custom_call.1']
    #allocation8 [shape = 'u8[4096]{0}', space=vmem, size = 0x1000, scoped, tag = 'input window, operand 2']
    #allocation9 [shape = 'u8[524288]{0}', space=vmem, size = 0x80000, scoped, tag = 'input window, operand 3']
    #allocation10 [shape = 's32[2]{0}', space=sflag, size = 0x8, scoped, tag = 'scoped memory for tpu_custom_call.1']
    #allocation11 [shape = 'u8[8192]{0}', space=vmem, size = 0x2000, scoped, tag = 'output window, operand 0, single buffered']
    %10 = vsyncpa [#allocation4], 0
    %11 = vsyncpa [#allocation7], 0
    %s12 = scalar_lea.sflag [#allocation7], 1
    %13 = vsyncpa %s12, 0
    %14 = vsyncpa [#allocation10], 0
    %s15 = scalar_lea.sflag [#allocation10], 1
    %16 = vsyncpa %s15, 0
    %17 = vsyncpa [#allocation5], 0
    loop: start=0, step=1, limit=4
    $region2: #{tpu_custom_call.1} parent=1 // loop_pre_header
      _
    $region3: #{tpu_custom_call.1} parent=1 // loop_header
      %s19 = sphi 0, %s23
      %p20 = scmp.ge.s32.totalorder %s19, 4
      %s26 = sphi 0, %s38
      %s27 = sphi 0, %s34
      %s28 = sphi 0, %s26
      %s29 = sphi 0, %s27
      %s30 = sphi 0, %s28
      %s31 = sphi 0, %s29
      %s41 = sphi 0, %s43
      %s44 = sphi 0, %s41
      %s45 = sphi 0, %s44
      %s61 = sphi 0, %s45
      %s67 = sphi 0, %s69
      %s70 = sphi 0, %s67
      %s71 = sphi 0, %s70
      %s87 = sphi 0, %s71
      %s93 = sphi 0, %s95
      %s96 = sphi 0, %s93
      %s97 = sphi 0, %s96
      %s113 = sphi 0, %s97
      %s119 = sphi 0, %s121
      %s122 = sphi 0, %s119
      %s123 = sphi 0, %s122
      %s139 = sphi 0, %s123
      %s143 = sphi 0, %s143
      %s145 = sphi 0, %s143
      %s146 = sphi 0, %s145
      %s160 = sphi 0, %s146
      %s166 = sphi 0, %s168
      %s169 = sphi 0, %s166
      %s170 = sphi 0, %s169
      %s186 = sphi 0, %s170
    $region4: #{tpu_custom_call.1} parent=1 // loop_header_branch
      %22 = sbr.rel (%p20) target = $region8
    $region5: #{tpu_custom_call.1} parent=1 // loop_body
      %s24 = ssub.s32 %s19, 1
      %s25 = ssub.s32 %s19, 2
      %s32 = sadd.s32 1, %s27
      %p33 = scmp.ge.s32.totalorder %s32, 2
      %s34 = scalar_select %p33, 0, %s32
      %s35 = sadd.s32 1, %s26
      %s36 = scalar_select %p33, %s35, %s26
      %p37 = scmp.ge.s32.totalorder %s36, 1
      %s38 = scalar_select %p37, 0, %s36
      %s39 = ssub.s32 %s26, %s38
      %p40 = scmp.eq.s32.totalorder %s39, 0
      %s42 = sadd.s32 %s41, 1
      %s43 = scalar_select %p40, %s41, %s42
      %p46 = pneg %p40
      %p47 = scmp.eq.s32.totalorder %s19, 1
      %p48 = por %p46, %p47
      %p49 = scmp.ne.s32.totalorder %s41, %s44
      %p50 = scmp.eq.s32.totalorder %s19, 0
      %p51 = por %p49, %p50
      %p52 = scmp.ne.s32.totalorder %s41, %s44
      %p53 = scmp.eq.s32.totalorder %s24, 1
      %p54 = por %p52, %p53
      %p55 = scmp.ne.s32.totalorder %s44, %s45
      %p56 = scmp.eq.s32.totalorder %s24, 0
      %p57 = por %p55, %p56
      %p58 = scmp.ne.s32.totalorder %s44, %s45
      %p59 = scmp.eq.s32.totalorder %s25, 1
      %p60 = por %p58, %p59
      %p62 = scmp.ne.s32.totalorder %s45, %s61
      %p63 = scmp.eq.s32.totalorder %s25, 0
      %p64 = por %p62, %p63
      %s65 = ssub.s32 %s27, %s34
      %p66 = scmp.eq.s32.totalorder %s65, 0
      %s68 = sadd.s32 %s67, 1
      %s69 = scalar_select %p66, %s67, %s68
      %p72 = pneg %p66
      %p73 = scmp.eq.s32.totalorder %s19, 1
      %p74 = por %p72, %p73
      %p75 = scmp.ne.s32.totalorder %s67, %s70
      %p76 = scmp.eq.s32.totalorder %s19, 0
      %p77 = por %p75, %p76
      %p78 = scmp.ne.s32.totalorder %s67, %s70
      %p79 = scmp.eq.s32.totalorder %s24, 1
      %p80 = por %p78, %p79
      %p81 = scmp.ne.s32.totalorder %s70, %s71
      %p82 = scmp.eq.s32.totalorder %s24, 0
      %p83 = por %p81, %p82
      %p84 = scmp.ne.s32.totalorder %s70, %s71
      %p85 = scmp.eq.s32.totalorder %s25, 1
      %p86 = por %p84, %p85
      %p88 = scmp.ne.s32.totalorder %s71, %s87
      %p89 = scmp.eq.s32.totalorder %s25, 0
      %p90 = por %p88, %p89
      %s91 = ssub.s32 %s27, %s34
      %p92 = scmp.eq.s32.totalorder %s91, 0
      %s94 = sadd.s32 %s93, 1
      %s95 = scalar_select %p92, %s93, %s94
      %p98 = pneg %p92
      %p99 = scmp.eq.s32.totalorder %s19, 1
      %p100 = por %p98, %p99
      %p101 = scmp.ne.s32.totalorder %s93, %s96
      %p102 = scmp.eq.s32.totalorder %s19, 0
      %p103 = por %p101, %p102
      %p104 = scmp.ne.s32.totalorder %s93, %s96
      %p105 = scmp.eq.s32.totalorder %s24, 1
      %p106 = por %p104, %p105
      %p107 = scmp.ne.s32.totalorder %s96, %s97
      %p108 = scmp.eq.s32.totalorder %s24, 0
      %p109 = por %p107, %p108
      %p110 = scmp.ne.s32.totalorder %s96, %s97
      %p111 = scmp.eq.s32.totalorder %s25, 1
      %p112 = por %p110, %p111
      %p114 = scmp.ne.s32.totalorder %s97, %s113
      %p115 = scmp.eq.s32.totalorder %s25, 0
      %p116 = por %p114, %p115
      %s117 = ssub.s32 %s27, %s34
      %p118 = scmp.eq.s32.totalorder %s117, 0
      %s120 = sadd.s32 %s119, 1
      %s121 = scalar_select %p118, %s119, %s120
      %p124 = pneg %p118
      %p125 = scmp.eq.s32.totalorder %s19, 1
      %p126 = por %p124, %p125
      %p127 = scmp.ne.s32.totalorder %s119, %s122
      %p128 = scmp.eq.s32.totalorder %s19, 0
      %p129 = por %p127, %p128
      %p130 = scmp.ne.s32.totalorder %s119, %s122
      %p131 = scmp.eq.s32.totalorder %s24, 1
      %p132 = por %p130, %p131
      %p133 = scmp.ne.s32.totalorder %s122, %s123
      %p134 = scmp.eq.s32.totalorder %s24, 0
      %p135 = por %p133, %p134
      %p136 = scmp.ne.s32.totalorder %s122, %s123
      %p137 = scmp.eq.s32.totalorder %s25, 1
      %p138 = por %p136, %p137
      %p140 = scmp.ne.s32.totalorder %s123, %s139
      %p141 = scmp.eq.s32.totalorder %s25, 0
      %p142 = por %p140, %p141
      %s144 = sadd.s32 %s143, 1
      %p147 = scmp.eq.s32.totalorder %s19, 1
      %p148 = scmp.ne.s32.totalorder %s143, %s145
      %p149 = scmp.eq.s32.totalorder %s19, 0
      %p150 = por %p148, %p149
      %p151 = scmp.ne.s32.totalorder %s143, %s145
      %p152 = scmp.eq.s32.totalorder %s24, 1
      %p153 = por %p151, %p152
      %p154 = scmp.ne.s32.totalorder %s145, %s146
      %p155 = scmp.eq.s32.totalorder %s24, 0
      %p156 = por %p154, %p155
      %p157 = scmp.ne.s32.totalorder %s145, %s146
      %p158 = scmp.eq.s32.totalorder %s25, 1
      %p159 = por %p157, %p158
      %p161 = scmp.ne.s32.totalorder %s146, %s160
      %p162 = scmp.eq.s32.totalorder %s25, 0
      %p163 = por %p161, %p162
      %s164 = ssub.s32 %s26, %s38
      %p165 = scmp.eq.s32.totalorder %s164, 0
      %s167 = sadd.s32 %s166, 1
      %s168 = scalar_select %p165, %s166, %s167
      %p171 = pneg %p165
      %p172 = scmp.eq.s32.totalorder %s19, 1
      %p173 = por %p171, %p172
      %p174 = scmp.ne.s32.totalorder %s166, %s169
      %p175 = scmp.eq.s32.totalorder %s19, 0
      %p176 = por %p174, %p175
      %p177 = scmp.ne.s32.totalorder %s166, %s169
      %p178 = scmp.eq.s32.totalorder %s24, 1
      %p179 = por %p177, %p178
      %p180 = scmp.ne.s32.totalorder %s169, %s170
      %p181 = scmp.eq.s32.totalorder %s24, 0
      %p182 = por %p180, %p181
      %p183 = scmp.ne.s32.totalorder %s169, %s170
      %p184 = scmp.eq.s32.totalorder %s25, 1
      %p185 = por %p183, %p184
      %p187 = scmp.ne.s32.totalorder %s170, %s186
      %p188 = scmp.eq.s32.totalorder %s25, 0
      %p189 = por %p187, %p188
      %p190 = scmp.le.s32.totalorder 1, %s19
      %p191 = scmp.lt.s32.totalorder %s19, 3
      %p192 = pnand %p190, %p191
      %p193 = pneg %p192
      // Predicated region
      $region9: #{tpu_custom_call.1} parent=5 // pred_check
        _
      $region10: #{tpu_custom_call.1} parent=5 // pred_check_branch
        %195 = sbr.rel (%p192) target = $region12
      $region11: #{tpu_custom_call.1} parent=5 // pred_region
        %s196 = ssub.s32 %s19, 1
        // Predicated region
        $region13: #{tpu_custom_call.1} parent=11 // pred_check
          %p197 = pneg %p57
        $region14: #{tpu_custom_call.1} parent=11 // pred_check_branch
          %199 = sbr.rel (%p197) target = $region16
        $region15: #{tpu_custom_call.1} parent=11 // pred_region
          %s200 = smul.u32 2, %s28
          %s202 = ssub.s32 256, 256
          %203 = vsyncadd [#allocation4], %s202
          %s204 = smul.addr %s200, 128
          %s205 = scalar_lea.hbm %s0, %s204
          %s206 = sshll.u32 [#allocation3], 4
          %s207 = int_to_ptr.vmem [resolvable:$true] %s206
          %212 = dma.hbm_to_vmem [thread:$0]  %s205, 256, %s207, [#allocation4], 128, 128, 8
        $region16: #{tpu_custom_call.1} parent=11 // pred_fallthru
          _
        // Predicated region
        $region17: #{tpu_custom_call.1} parent=11 // pred_check
          %p213 = pneg %p156
        $region18: #{tpu_custom_call.1} parent=11 // pred_check_branch
          %215 = sbr.rel (%p213) target = $region20
        $region19: #{tpu_custom_call.1} parent=11 // pred_region
          _
        $region20: #{tpu_custom_call.1} parent=11 // pred_fallthru
          _
      $region12: #{tpu_custom_call.1} parent=5 // pred_fallthru
        _
      %p216 = scmp.lt.s32.totalorder %s19, 2
      // Predicated region
      $region21: #{tpu_custom_call.1} parent=5 // pred_check
        %p217 = pneg %p216
      $region22: #{tpu_custom_call.1} parent=5 // pred_check_branch
        %219 = sbr.rel (%p217) target = $region24
      $region23: #{tpu_custom_call.1} parent=5 // pred_region
        // Predicated region
        $region25: #{tpu_custom_call.1} parent=23 // pred_check
          %p220 = pneg %p77
        $region26: #{tpu_custom_call.1} parent=23 // pred_check_branch
          %222 = sbr.rel (%p220) target = $region28
        $region27: #{tpu_custom_call.1} parent=23 // pred_region
          %s223 = sand.u32 %s19, 1
          %s224 = scalar_lea.sflag [#allocation7], %s223
          %s225 = sand.u32 %s67, 1
          %s226 = smul.addr %s225, 512
          %s227 = scalar_lea.vmem [#allocation6], %s226
          %s228 = smul.u32 4, %s27
          %s230 = ssub.s32 8192, 8192
          %231 = vsyncadd %s224, %s230
          %s232 = smul.addr %s228, 128
          %s233 = scalar_lea.hbm %s1, %s232
          %s234 = sshll.u32 %s227, 4
          %s235 = int_to_ptr.vmem [resolvable:$true] %s234
          %240 = dma.hbm_to_vmem [thread:$0]  %s233, 8192, %s235, %s224, 1024, 512, 32
        $region28: #{tpu_custom_call.1} parent=23 // pred_fallthru
          _
        // Predicated region
        $region29: #{tpu_custom_call.1} parent=23 // pred_check
          %p241 = pneg %p103
        $region30: #{tpu_custom_call.1} parent=23 // pred_check_branch
          %243 = sbr.rel (%p241) target = $region32
        $region31: #{tpu_custom_call.1} parent=23 // pred_region
          %s244 = sand.u32 %s19, 1
          %s245 = scalar_lea.sflag [#allocation7], %s244
          %s246 = sand.u32 %s93, 1
          %s247 = smul.addr %s246, 4
          %s248 = scalar_lea.vmem [#allocation8], %s247
          %s249 = smul.u32 4, %s27
          %s251 = ssub.s32 64, 64
          %252 = vsyncadd %s245, %s251
          %s253 = smul.addr %s249, 16
          %s254 = scalar_lea.hbm %s2, %s253
          %s256 = sshll.u32 %s248, 4
          %s257 = int_to_ptr.vmem [resolvable:$true] %s256
          %259 = dma.hbm_to_vmem [thread:$0]  %s254, 64, %s257, %s245
        $region32: #{tpu_custom_call.1} parent=23 // pred_fallthru
          _
        // Predicated region
        $region33: #{tpu_custom_call.1} parent=23 // pred_check
          %p260 = pneg %p129
        $region34: #{tpu_custom_call.1} parent=23 // pred_check_branch
          %262 = sbr.rel (%p260) target = $region36
        $region35: #{tpu_custom_call.1} parent=23 // pred_region
          %s263 = sand.u32 %s119, 1
          %s264 = scalar_lea.sflag [#allocation10], %s263
          %s265 = sand.u32 %s119, 1
          %s266 = smul.addr %s265, 512
          %s267 = scalar_lea.vmem [#allocation9], %s266
          %s268 = smul.u32 64, %s27
          %s270 = ssub.s32 8192, 8192
          %271 = vsyncadd %s264, %s270
          %s272 = smul.addr %s268, 128
          %s273 = scalar_lea.hbm %s3, %s272
          %s274 = sshll.u32 %s267, 4
          %s275 = int_to_ptr.vmem [resolvable:$true] %s274
          %280 = dma.hbm_to_vmem [thread:$0]  %s273, 8192, %s275, %s264, 128, 128, 8
        $region36: #{tpu_custom_call.1} parent=23 // pred_fallthru
          _
      $region24: #{tpu_custom_call.1} parent=5 // pred_fallthru
        _
      %p281 = scmp.le.s32.totalorder 1, %s19
      %p282 = scmp.lt.s32.totalorder %s19, 3
      %p283 = pnand %p281, %p282
      %p284 = pneg %p283
      // Predicated region
      $region37: #{tpu_custom_call.1} parent=5 // pred_check
        _
      $region38: #{tpu_custom_call.1} parent=5 // pred_check_branch
        %286 = sbr.rel (%p283) target = $region40
      $region39: #{tpu_custom_call.1} parent=5 // pred_region
        %s287 = ssub.s32 %s19, 1
        // Predicated region
        $region41: #{tpu_custom_call.1} parent=39 // pred_check
          %p288 = pneg %p57
        $region42: #{tpu_custom_call.1} parent=39 // pred_check_branch
          %290 = sbr.rel (%p288) target = $region44
        $region43: #{tpu_custom_call.1} parent=39 // pred_region
          %291 = dma.done [#allocation4], 256
        $region44: #{tpu_custom_call.1} parent=39 // pred_fallthru
          _
        %s292 = sand.u32 %s24, 1
        %s293 = scalar_lea.sflag [#allocation7], %s292
        %s294 = sand.u32 %s70, 1
        %s295 = smul.addr %s294, 512
        %s296 = scalar_lea.vmem [#allocation6], %s295
        // Predicated region
        $region45: #{tpu_custom_call.1} parent=39 // pred_check
          %p297 = pneg %p83
        $region46: #{tpu_custom_call.1} parent=39 // pred_check_branch
          %299 = sbr.rel (%p297) target = $region48
        $region47: #{tpu_custom_call.1} parent=39 // pred_region
          %300 = dma.done %s293, 8192
        $region48: #{tpu_custom_call.1} parent=39 // pred_fallthru
          _
        %s301 = sand.u32 %s24, 1
        %s302 = scalar_lea.sflag [#allocation7], %s301
        %s303 = sand.u32 %s96, 1
        %s304 = smul.addr %s303, 4
        %s305 = scalar_lea.vmem [#allocation8], %s304
        // Predicated region
        $region49: #{tpu_custom_call.1} parent=39 // pred_check
          %p306 = pneg %p109
        $region50: #{tpu_custom_call.1} parent=39 // pred_check_branch
          %308 = sbr.rel (%p306) target = $region52
        $region51: #{tpu_custom_call.1} parent=39 // pred_region
          %309 = dma.done %s302, 64
        $region52: #{tpu_custom_call.1} parent=39 // pred_fallthru
          _
        %s310 = sand.u32 %s122, 1
        %s311 = scalar_lea.sflag [#allocation10], %s310
        %s312 = sand.u32 %s122, 1
        %s313 = smul.addr %s312, 512
        %s314 = scalar_lea.vmem [#allocation9], %s313
        // Predicated region
        $region53: #{tpu_custom_call.1} parent=39 // pred_check
          %p315 = pneg %p135
        $region54: #{tpu_custom_call.1} parent=39 // pred_check_branch
          %317 = sbr.rel (%p315) target = $region56
        $region55: #{tpu_custom_call.1} parent=39 // pred_region
          %318 = dma.done %s311, 8192
        $region56: #{tpu_custom_call.1} parent=39 // pred_fallthru
          _
        %p319 = pneg %p57
        %p320 = pneg %p54
        %s321 = sand.u32 %s24, 1
        %s322 = scalar_lea.sflag [#allocation7], %s321
        %s323 = sand.u32 %s70, 1
        %s324 = smul.addr %s323, 512
        %s325 = scalar_lea.vmem [#allocation6], %s324
        %p326 = pneg %p83
        %p327 = pneg %p80
        %s328 = sand.u32 %s24, 1
        %s329 = scalar_lea.sflag [#allocation7], %s328
        %s330 = sand.u32 %s96, 1
        %s331 = smul.addr %s330, 4
        %s332 = scalar_lea.vmem [#allocation8], %s331
        %p333 = pneg %p109
        %p334 = pneg %p106
        %s335 = sand.u32 %s122, 1
        %s336 = scalar_lea.sflag [#allocation10], %s335
        %s337 = sand.u32 %s122, 1
        %s338 = smul.addr %s337, 512
        %s339 = scalar_lea.vmem [#allocation9], %s338
        %p340 = pneg %p135
        %p341 = pneg %p132
        %p342 = pneg %p156
        %p343 = pneg %p153
        %p344 = pneg %p182
        %p345 = pneg %p179
        %s346 = smul.u32 2, %s28
        %s347 = smul.u32 4, %s29
        %s348 = smul.u32 4, %s29
        %s349 = smul.u32 64, %s29
        %s350 = smul.u32 2, %s28
        %p351 = scmp.eq.s32.totalorder %s29, 0
        // Predicated region
        $region57: #{tpu_custom_call.1} parent=39 // pred_check
          %p352 = pneg %p351
        $region58: #{tpu_custom_call.1} parent=39 // pred_check_branch
          %354 = sbr.rel (%p352) target = $region60
        $region59: #{tpu_custom_call.1} parent=39 // pred_region
          %355 = vst [vmem:[#allocation2] sm:$0xff] 0.0
          %356 = vst [vmem:[#allocation2 + $0x8] sm:$0xff] 0.0
        $region60: #{tpu_custom_call.1} parent=39 // pred_fallthru
          _
        %v357 = vld [vmem:[#allocation3] sm:$0xff]
        %v358 = vld [vmem:[#allocation3 + $0x8] sm:$0xff]
        %v359 = vld [vmem:[%s296] sm:$0xff]
        %v360 = vld [vmem:[%s296 + $0x8] sm:$0xff]
        %v361 = vld [vmem:[%s296 + $0x10] sm:$0xff]
        %v362 = vld [vmem:[%s296 + $0x18] sm:$0xff]
        %v363 = vld [vmem:[%s296 + $0x20] sm:$0xff]
        %v364 = vld [vmem:[%s296 + $0x28] sm:$0xff]
        %v365 = vld [vmem:[%s296 + $0x30] sm:$0xff]
        %v366 = vld [vmem:[%s296 + $0x38] sm:$0xff]
        %v367 = vld [vmem:[%s296 + $0x40] sm:$0xff]
        %v368 = vld [vmem:[%s296 + $0x48] sm:$0xff]
        %v369 = vld [vmem:[%s296 + $0x50] sm:$0xff]
        %v370 = vld [vmem:[%s296 + $0x58] sm:$0xff]
        %v371 = vld [vmem:[%s296 + $0x60] sm:$0xff]
        %v372 = vld [vmem:[%s296 + $0x68] sm:$0xff]
        %v373 = vld [vmem:[%s296 + $0x70] sm:$0xff]
        %v374 = vld [vmem:[%s296 + $0x78] sm:$0xff]
        %v375 = vld [vmem:[%s296 + $0x80] sm:$0xff]
        %v376 = vld [vmem:[%s296 + $0x88] sm:$0xff]
        %v377 = vld [vmem:[%s296 + $0x90] sm:$0xff]
        %v378 = vld [vmem:[%s296 + $0x98] sm:$0xff]
        %v379 = vld [vmem:[%s296 + $0xa0] sm:$0xff]
        %v380 = vld [vmem:[%s296 + $0xa8] sm:$0xff]
        %v381 = vld [vmem:[%s296 + $0xb0] sm:$0xff]
        %v382 = vld [vmem:[%s296 + $0xb8] sm:$0xff]
        %v383 = vld [vmem:[%s296 + $0xc0] sm:$0xff]
        %v384 = vld [vmem:[%s296 + $0xc8] sm:$0xff]
        %v385 = vld [vmem:[%s296 + $0xd0] sm:$0xff]
        %v386 = vld [vmem:[%s296 + $0xd8] sm:$0xff]
        %v387 = vld [vmem:[%s296 + $0xe0] sm:$0xff]
        %v388 = vld [vmem:[%s296 + $0xe8] sm:$0xff]
        %v389 = vld [vmem:[%s296 + $0xf0] sm:$0xff]
        %v390 = vld [vmem:[%s296 + $0xf8] sm:$0xff]
        %v391 = vld [vmem:[%s296 + $0x100] sm:$0xff]
        %v392 = vld [vmem:[%s296 + $0x108] sm:$0xff]
        %v393 = vld [vmem:[%s296 + $0x110] sm:$0xff]
        %v394 = vld [vmem:[%s296 + $0x118] sm:$0xff]
        %v395 = vld [vmem:[%s296 + $0x120] sm:$0xff]
        %v396 = vld [vmem:[%s296 + $0x128] sm:$0xff]
        %v397 = vld [vmem:[%s296 + $0x130] sm:$0xff]
        %v398 = vld [vmem:[%s296 + $0x138] sm:$0xff]
        %v399 = vld [vmem:[%s296 + $0x140] sm:$0xff]
        %v400 = vld [vmem:[%s296 + $0x148] sm:$0xff]
        %v401 = vld [vmem:[%s296 + $0x150] sm:$0xff]
        %v402 = vld [vmem:[%s296 + $0x158] sm:$0xff]
        %v403 = vld [vmem:[%s296 + $0x160] sm:$0xff]
        %v404 = vld [vmem:[%s296 + $0x168] sm:$0xff]
        %v405 = vld [vmem:[%s296 + $0x170] sm:$0xff]
        %v406 = vld [vmem:[%s296 + $0x178] sm:$0xff]
        %v407 = vld [vmem:[%s296 + $0x180] sm:$0xff]
        %v408 = vld [vmem:[%s296 + $0x188] sm:$0xff]
        %v409 = vld [vmem:[%s296 + $0x190] sm:$0xff]
        %v410 = vld [vmem:[%s296 + $0x198] sm:$0xff]
        %v411 = vld [vmem:[%s296 + $0x1a0] sm:$0xff]
        %v412 = vld [vmem:[%s296 + $0x1a8] sm:$0xff]
        %v413 = vld [vmem:[%s296 + $0x1b0] sm:$0xff]
        %v414 = vld [vmem:[%s296 + $0x1b8] sm:$0xff]
        %v415 = vld [vmem:[%s296 + $0x1c0] sm:$0xff]
        %v416 = vld [vmem:[%s296 + $0x1c8] sm:$0xff]
        %v417 = vld [vmem:[%s296 + $0x1d0] sm:$0xff]
        %v418 = vld [vmem:[%s296 + $0x1d8] sm:$0xff]
        %v419 = vld [vmem:[%s296 + $0x1e0] sm:$0xff]
        %v420 = vld [vmem:[%s296 + $0x1e8] sm:$0xff]
        %v421 = vld [vmem:[%s296 + $0x1f0] sm:$0xff]
        %v422 = vld [vmem:[%s296 + $0x1f8] sm:$0xff]
        %v423 = vld [vmem:[%s305] sm:$0xf]
        %v425 = vlaneseq
        %v426 = vshrl.u32 %v425, 7
        %v427 = vsub.s32 0, %v426
        %v428 = vrot.slane %v423, %v427
        %v429 = vlaneseq
        %v430 = vshrl.u32 %v429, 7
        %v431 = vsub.s32 1, %v430
        %v432 = vrot.slane %v423, %v431
        %v433 = vlaneseq
        %v434 = vshrl.u32 %v433, 7
        %v435 = vsub.s32 2, %v434
        %v436 = vrot.slane %v423, %v435
        %v437 = vlaneseq
        %v438 = vshrl.u32 %v437, 7
        %v439 = vsub.s32 3, %v438
        %v440 = vrot.slane %v423, %v439
        %445 = vmatprep.subr.mxu0 %v360
        %446 = vmatpush1.msra.mxu0 %v359
        %447 = vmatprep.subr.mxu0 %v364
        %448 = vmatpush1.msra.mxu0 %v363
        %449 = vmatprep.subr.mxu0 %v368
        %450 = vmatpush1.msra.mxu0 %v367
        %451 = vmatprep.subr.mxu0 %v372
        %452 = vmatpush1.msra.mxu0 %v371
        %453 = vmatprep.subr.mxu0 %v376
        %454 = vmatpush1.msra.mxu0 %v375
        %455 = vmatprep.subr.mxu0 %v380
        %456 = vmatpush1.msra.mxu0 %v379
        %457 = vmatprep.subr.mxu0 %v384
        %458 = vmatpush1.msra.mxu0 %v383
        %459 = vmatprep.subr.mxu0 %v388
        %460 = vmatpush1.msra.mxu0 %v387
        %461 = vmatprep.subr.mxu0 %v392
        %462 = vmatpush1.msra.mxu0 %v391
        %463 = vmatprep.subr.mxu0 %v396
        %464 = vmatpush1.msra.mxu0 %v395
        %465 = vmatprep.subr.mxu0 %v400
        %466 = vmatpush1.msra.mxu0 %v399
        %467 = vmatprep.subr.mxu0 %v404
        %468 = vmatpush1.msra.mxu0 %v403
        %469 = vmatprep.subr.mxu0 %v408
        %470 = vmatpush1.msra.mxu0 %v407
        %471 = vmatprep.subr.mxu0 %v412
        %472 = vmatpush1.msra.mxu0 %v411
        %473 = vmatprep.subr.mxu0 %v416
        %474 = vmatpush1.msra.mxu0 %v415
        %475 = vmatprep.subr.mxu0 %v420
        %476 = vmatpush1.msra.mxu0 %v419
        %477 = vmatprep.subr.mxu0 0.0
        %478 = vmatpush1.msra.mxu0 0.0
        %479 = vmatprep.subr.mxu0 0.0
        %480 = vmatpush1.msra.mxu0 0.0
        %481 = vmatprep.subr.mxu0 0.0
        %482 = vmatpush1.msra.mxu0 0.0
        %483 = vmatprep.subr.mxu0 0.0
        %484 = vmatpush1.msra.mxu0 0.0
        %485 = vmatprep.subr.mxu0 0.0
        %486 = vmatpush1.msra.mxu0 0.0
        %487 = vmatprep.subr.mxu0 0.0
        %488 = vmatpush1.msra.mxu0 0.0
        %489 = vmatprep.subr.mxu0 0.0
        %490 = vmatpush1.msra.mxu0 0.0
        %491 = vmatprep.subr.mxu0 0.0
        %492 = vmatpush1.msra.mxu0 0.0
        %493 = vmatprep.subr.mxu0 0.0
        %494 = vmatpush1.msra.mxu0 0.0
        %495 = vmatprep.subr.mxu0 0.0
        %496 = vmatpush1.msra.mxu0 0.0
        %497 = vmatprep.subr.mxu0 0.0
        %498 = vmatpush1.msra.mxu0 0.0
        %499 = vmatprep.subr.mxu0 0.0
        %500 = vmatpush1.msra.mxu0 0.0
        %501 = vmatprep.subr.mxu0 0.0
        %502 = vmatpush1.msra.mxu0 0.0
        %503 = vmatprep.subr.mxu0 0.0
        %504 = vmatpush1.msra.mxu0 0.0
        %505 = vmatprep.subr.mxu0 0.0
        %506 = vmatpush1.msra.mxu0 0.0
        %507 = vmatprep.subr.mxu0 0.0
        %508 = vmatpush1.msra.mxu0 0.0
        %509 = vmatprep.mubr.f32.mxu0 0.0
        %510 = vmatmul.mubr.f32.gmra.mrb[0].mxu0 %v357
        %v511 = vpop.f32.mrb[0].mxu0
        %v512 = vadd.f32 %v428, %v511
        %v513 = vpop.f32.mrb[0].mxu0
        %v514 = vadd.f32 %v432, %v513
        %515 = vmatprep.mubr.f32.mxu0 0.0
        %516 = vmatmul.mubr.f32.gmra.mrb[0].mxu0 %v358
        %v517 = vpop.f32.mrb[0].mxu0
        %v518 = vadd.f32 %v428, %v517
        %v519 = vpop.f32.mrb[0].mxu0
        %v520 = vadd.f32 %v432, %v519
        %521 = vdwg.mxu0
        %522 = vmatprep.subr.mxu0 %v362
        %523 = vmatpush1.msra.mxu0 %v361
        %524 = vmatprep.subr.mxu0 %v366
        %525 = vmatpush1.msra.mxu0 %v365
        %526 = vmatprep.subr.mxu0 %v370
        %527 = vmatpush1.msra.mxu0 %v369
        %528 = vmatprep.subr.mxu0 %v374
        %529 = vmatpush1.msra.mxu0 %v373
        %530 = vmatprep.subr.mxu0 %v378
        %531 = vmatpush1.msra.mxu0 %v377
        %532 = vmatprep.subr.mxu0 %v382
        %533 = vmatpush1.msra.mxu0 %v381
        %534 = vmatprep.subr.mxu0 %v386
        %535 = vmatpush1.msra.mxu0 %v385
        %536 = vmatprep.subr.mxu0 %v390
        %537 = vmatpush1.msra.mxu0 %v389
        %538 = vmatprep.subr.mxu0 %v394
        %539 = vmatpush1.msra.mxu0 %v393
        %540 = vmatprep.subr.mxu0 %v398
        %541 = vmatpush1.msra.mxu0 %v397
        %542 = vmatprep.subr.mxu0 %v402
        %543 = vmatpush1.msra.mxu0 %v401
        %544 = vmatprep.subr.mxu0 %v406
        %545 = vmatpush1.msra.mxu0 %v405
        %546 = vmatprep.subr.mxu0 %v410
        %547 = vmatpush1.msra.mxu0 %v409
        %548 = vmatprep.subr.mxu0 %v414
        %549 = vmatpush1.msra.mxu0 %v413
        %550 = vmatprep.subr.mxu0 %v418
        %551 = vmatpush1.msra.mxu0 %v417
        %552 = vmatprep.subr.mxu0 %v422
        %553 = vmatpush1.msra.mxu0 %v421
        %554 = vmatprep.subr.mxu0 0.0
        %555 = vmatpush1.msra.mxu0 0.0
        %556 = vmatprep.subr.mxu0 0.0
        %557 = vmatpush1.msra.mxu0 0.0
        %558 = vmatprep.subr.mxu0 0.0
        %559 = vmatpush1.msra.mxu0 0.0
        %560 = vmatprep.subr.mxu0 0.0
        %561 = vmatpush1.msra.mxu0 0.0
        %562 = vmatprep.subr.mxu0 0.0
        %563 = vmatpush1.msra.mxu0 0.0
        %564 = vmatprep.subr.mxu0 0.0
        %565 = vmatpush1.msra.mxu0 0.0
        %566 = vmatprep.subr.mxu0 0.0
        %567 = vmatpush1.msra.mxu0 0.0
        %568 = vmatprep.subr.mxu0 0.0
        %569 = vmatpush1.msra.mxu0 0.0
        %570 = vmatprep.subr.mxu0 0.0
        %571 = vmatpush1.msra.mxu0 0.0
        %572 = vmatprep.subr.mxu0 0.0
        %573 = vmatpush1.msra.mxu0 0.0
        %574 = vmatprep.subr.mxu0 0.0
        %575 = vmatpush1.msra.mxu0 0.0
        %576 = vmatprep.subr.mxu0 0.0
        %577 = vmatpush1.msra.mxu0 0.0
        %578 = vmatprep.subr.mxu0 0.0
        %579 = vmatpush1.msra.mxu0 0.0
        %580 = vmatprep.subr.mxu0 0.0
        %581 = vmatpush1.msra.mxu0 0.0
        %582 = vmatprep.subr.mxu0 0.0
        %583 = vmatpush1.msra.mxu0 0.0
        %584 = vmatprep.subr.mxu0 0.0
        %585 = vmatpush1.msra.mxu0 0.0
        %586 = vmatprep.mubr.f32.mxu0 0.0
        %587 = vmatmul.mubr.f32.gmra.mrb[0].mxu0 %v357
        %v588 = vpop.f32.mrb[0].mxu0
        %v589 = vadd.f32 %v436, %v588
        %v590 = vpop.f32.mrb[0].mxu0
        %v591 = vadd.f32 %v440, %v590
        %592 = vmatprep.mubr.f32.mxu0 0.0
        %593 = vmatmul.mubr.f32.gmra.mrb[0].mxu0 %v358
        %v594 = vpop.f32.mrb[0].mxu0
        %v595 = vadd.f32 %v436, %v594
        %v596 = vpop.f32.mrb[0].mxu0
        %v597 = vadd.f32 %v440, %v596
        %598 = vdwg.mxu0
        %v599 = vmax.f32 %v512, 0.0
        %v600 = vmax.f32 %v514, 0.0
        %v601 = vmax.f32 %v589, 0.0
        %v602 = vmax.f32 %v591, 0.0
        %v603 = vmax.f32 %v518, 0.0
        %v604 = vmax.f32 %v520, 0.0
        %v605 = vmax.f32 %v595, 0.0
        %v606 = vmax.f32 %v597, 0.0
        %v607 = vld [vmem:[#allocation2] sm:$0xff]
        %v608 = vld [vmem:[#allocation2 + $0x8] sm:$0xff]
        %v609 = vld [vmem:[%s314] sm:$0xff]
        %v610 = vld [vmem:[%s314 + $0x8] sm:$0xff]
        %v611 = vld [vmem:[%s314 + $0x10] sm:$0xff]
        %v612 = vld [vmem:[%s314 + $0x18] sm:$0xff]
        %v613 = vld [vmem:[%s314 + $0x20] sm:$0xff]
        %v614 = vld [vmem:[%s314 + $0x28] sm:$0xff]
        %v615 = vld [vmem:[%s314 + $0x30] sm:$0xff]
        %v616 = vld [vmem:[%s314 + $0x38] sm:$0xff]
        %v617 = vld [vmem:[%s314 + $0x40] sm:$0xff]
        %v618 = vld [vmem:[%s314 + $0x48] sm:$0xff]
        %v619 = vld [vmem:[%s314 + $0x50] sm:$0xff]
        %v620 = vld [vmem:[%s314 + $0x58] sm:$0xff]
        %v621 = vld [vmem:[%s314 + $0x60] sm:$0xff]
        %v622 = vld [vmem:[%s314 + $0x68] sm:$0xff]
        %v623 = vld [vmem:[%s314 + $0x70] sm:$0xff]
        %v624 = vld [vmem:[%s314 + $0x78] sm:$0xff]
        %v625 = vld [vmem:[%s314 + $0x80] sm:$0xff]
        %v626 = vld [vmem:[%s314 + $0x88] sm:$0xff]
        %v627 = vld [vmem:[%s314 + $0x90] sm:$0xff]
        %v628 = vld [vmem:[%s314 + $0x98] sm:$0xff]
        %v629 = vld [vmem:[%s314 + $0xa0] sm:$0xff]
        %v630 = vld [vmem:[%s314 + $0xa8] sm:$0xff]
        %v631 = vld [vmem:[%s314 + $0xb0] sm:$0xff]
        %v632 = vld [vmem:[%s314 + $0xb8] sm:$0xff]
        %v633 = vld [vmem:[%s314 + $0xc0] sm:$0xff]
        %v634 = vld [vmem:[%s314 + $0xc8] sm:$0xff]
        %v635 = vld [vmem:[%s314 + $0xd0] sm:$0xff]
        %v636 = vld [vmem:[%s314 + $0xd8] sm:$0xff]
        %v637 = vld [vmem:[%s314 + $0xe0] sm:$0xff]
        %v638 = vld [vmem:[%s314 + $0xe8] sm:$0xff]
        %v639 = vld [vmem:[%s314 + $0xf0] sm:$0xff]
        %v640 = vld [vmem:[%s314 + $0xf8] sm:$0xff]
        %v641 = vld [vmem:[%s314 + $0x100] sm:$0xff]
        %v642 = vld [vmem:[%s314 + $0x108] sm:$0xff]
        %v643 = vld [vmem:[%s314 + $0x110] sm:$0xff]
        %v644 = vld [vmem:[%s314 + $0x118] sm:$0xff]
        %v645 = vld [vmem:[%s314 + $0x120] sm:$0xff]
        %v646 = vld [vmem:[%s314 + $0x128] sm:$0xff]
        %v647 = vld [vmem:[%s314 + $0x130] sm:$0xff]
        %v648 = vld [vmem:[%s314 + $0x138] sm:$0xff]
        %v649 = vld [vmem:[%s314 + $0x140] sm:$0xff]
        %v650 = vld [vmem:[%s314 + $0x148] sm:$0xff]
        %v651 = vld [vmem:[%s314 + $0x150] sm:$0xff]
        %v652 = vld [vmem:[%s314 + $0x158] sm:$0xff]
        %v653 = vld [vmem:[%s314 + $0x160] sm:$0xff]
        %v654 = vld [vmem:[%s314 + $0x168] sm:$0xff]
        %v655 = vld [vmem:[%s314 + $0x170] sm:$0xff]
        %v656 = vld [vmem:[%s314 + $0x178] sm:$0xff]
        %v657 = vld [vmem:[%s314 + $0x180] sm:$0xff]
        %v658 = vld [vmem:[%s314 + $0x188] sm:$0xff]
        %v659 = vld [vmem:[%s314 + $0x190] sm:$0xff]
        %v660 = vld [vmem:[%s314 + $0x198] sm:$0xff]
        %v661 = vld [vmem:[%s314 + $0x1a0] sm:$0xff]
        %v662 = vld [vmem:[%s314 + $0x1a8] sm:$0xff]
        %v663 = vld [vmem:[%s314 + $0x1b0] sm:$0xff]
        %v664 = vld [vmem:[%s314 + $0x1b8] sm:$0xff]
        %v665 = vld [vmem:[%s314 + $0x1c0] sm:$0xff]
        %v666 = vld [vmem:[%s314 + $0x1c8] sm:$0xff]
        %v667 = vld [vmem:[%s314 + $0x1d0] sm:$0xff]
        %v668 = vld [vmem:[%s314 + $0x1d8] sm:$0xff]
        %v669 = vld [vmem:[%s314 + $0x1e0] sm:$0xff]
        %v670 = vld [vmem:[%s314 + $0x1e8] sm:$0xff]
        %v671 = vld [vmem:[%s314 + $0x1f0] sm:$0xff]
        %v672 = vld [vmem:[%s314 + $0x1f8] sm:$0xff]
        %673 = vmatprep.subr.mxu0 0.0
        %674 = vmatpush1.msra.mxu0 %v609
        %675 = vmatprep.subr.mxu0 0.0
        %676 = vmatpush1.msra.mxu0 %v610
        %677 = vmatprep.subr.mxu0 0.0
        %678 = vmatpush1.msra.mxu0 %v611
        %679 = vmatprep.subr.mxu0 0.0
        %680 = vmatpush1.msra.mxu0 %v612
        %681 = vmatprep.subr.mxu0 0.0
        %682 = vmatpush1.msra.mxu0 %v613
        %683 = vmatprep.subr.mxu0 0.0
        %684 = vmatpush1.msra.mxu0 %v614
        %685 = vmatprep.subr.mxu0 0.0
        %686 = vmatpush1.msra.mxu0 %v615
        %687 = vmatprep.subr.mxu0 0.0
        %688 = vmatpush1.msra.mxu0 %v616
        %689 = vmatprep.subr.mxu0 0.0
        %690 = vmatpush1.msra.mxu0 %v617
        %691 = vmatprep.subr.mxu0 0.0
        %692 = vmatpush1.msra.mxu0 %v618
        %693 = vmatprep.subr.mxu0 0.0
        %694 = vmatpush1.msra.mxu0 %v619
        %695 = vmatprep.subr.mxu0 0.0
        %696 = vmatpush1.msra.mxu0 %v620
        %697 = vmatprep.subr.mxu0 0.0
        %698 = vmatpush1.msra.mxu0 %v621
        %699 = vmatprep.subr.mxu0 0.0
        %700 = vmatpush1.msra.mxu0 %v622
        %701 = vmatprep.subr.mxu0 0.0
        %702 = vmatpush1.msra.mxu0 %v623
        %703 = vmatprep.subr.mxu0 0.0
        %704 = vmatpush1.msra.mxu0 %v624
        %705 = vmatprep.subr.mxu0 0.0
        %706 = vmatpush1.msra.mxu0 %v625
        %707 = vmatprep.subr.mxu0 0.0
        %708 = vmatpush1.msra.mxu0 %v626
        %709 = vmatprep.subr.mxu0 0.0
        %710 = vmatpush1.msra.mxu0 %v627
        %711 = vmatprep.subr.mxu0 0.0
        %712 = vmatpush1.msra.mxu0 %v628
        %713 = vmatprep.subr.mxu0 0.0
        %714 = vmatpush1.msra.mxu0 %v629
        %715 = vmatprep.subr.mxu0 0.0
        %716 = vmatpush1.msra.mxu0 %v630
        %717 = vmatprep.subr.mxu0 0.0
        %718 = vmatpush1.msra.mxu0 %v631
        %719 = vmatprep.subr.mxu0 0.0
        %720 = vmatpush1.msra.mxu0 %v632
        %721 = vmatprep.subr.mxu0 0.0
        %722 = vmatpush1.msra.mxu0 %v633
        %723 = vmatprep.subr.mxu0 0.0
        %724 = vmatpush1.msra.mxu0 %v634
        %725 = vmatprep.subr.mxu0 0.0
        %726 = vmatpush1.msra.mxu0 %v635
        %727 = vmatprep.subr.mxu0 0.0
        %728 = vmatpush1.msra.mxu0 %v636
        %729 = vmatprep.subr.mxu0 0.0
        %730 = vmatpush1.msra.mxu0 %v637
        %731 = vmatprep.subr.mxu0 0.0
        %732 = vmatpush1.msra.mxu0 %v638
        %733 = vmatprep.subr.mxu0 0.0
        %734 = vmatpush1.msra.mxu0 %v639
        %735 = vmatprep.subr.mxu0 0.0
        %736 = vmatpush1.msra.mxu0 %v640
        %737 = vmatprep.mubr.f32.mxu0 %v600
        %738 = vmatmul.mubr.f32.gmra.mrb[0].mxu0 %v599
        %v739 = vpop.f32.mrb[0].mxu0
        %v740 = vadd.f32 0.0, %v739
        %v741 = vpop.f32.mrb[0].mxu0
        %742 = vmatprep.mubr.f32.mxu0 %v604
        %743 = vmatmul.mubr.f32.gmra.mrb[0].mxu0 %v603
        %v744 = vpop.f32.mrb[0].mxu0
        %v745 = vadd.f32 0.0, %v744
        %v746 = vpop.f32.mrb[0].mxu0
        %747 = vdwg.mxu0
        %748 = vmatprep.subr.mxu0 0.0
        %749 = vmatpush1.msra.mxu0 %v641
        %750 = vmatprep.subr.mxu0 0.0
        %751 = vmatpush1.msra.mxu0 %v642
        %752 = vmatprep.subr.mxu0 0.0
        %753 = vmatpush1.msra.mxu0 %v643
        %754 = vmatprep.subr.mxu0 0.0
        %755 = vmatpush1.msra.mxu0 %v644
        %756 = vmatprep.subr.mxu0 0.0
        %757 = vmatpush1.msra.mxu0 %v645
        %758 = vmatprep.subr.mxu0 0.0
        %759 = vmatpush1.msra.mxu0 %v646
        %760 = vmatprep.subr.mxu0 0.0
        %761 = vmatpush1.msra.mxu0 %v647
        %762 = vmatprep.subr.mxu0 0.0
        %763 = vmatpush1.msra.mxu0 %v648
        %764 = vmatprep.subr.mxu0 0.0
        %765 = vmatpush1.msra.mxu0 %v649
        %766 = vmatprep.subr.mxu0 0.0
        %767 = vmatpush1.msra.mxu0 %v650
        %768 = vmatprep.subr.mxu0 0.0
        %769 = vmatpush1.msra.mxu0 %v651
        %770 = vmatprep.subr.mxu0 0.0
        %771 = vmatpush1.msra.mxu0 %v652
        %772 = vmatprep.subr.mxu0 0.0
        %773 = vmatpush1.msra.mxu0 %v653
        %774 = vmatprep.subr.mxu0 0.0
        %775 = vmatpush1.msra.mxu0 %v654
        %776 = vmatprep.subr.mxu0 0.0
        %777 = vmatpush1.msra.mxu0 %v655
        %778 = vmatprep.subr.mxu0 0.0
        %779 = vmatpush1.msra.mxu0 %v656
        %780 = vmatprep.subr.mxu0 0.0
        %781 = vmatpush1.msra.mxu0 %v657
        %782 = vmatprep.subr.mxu0 0.0
        %783 = vmatpush1.msra.mxu0 %v658
        %784 = vmatprep.subr.mxu0 0.0
        %785 = vmatpush1.msra.mxu0 %v659
        %786 = vmatprep.subr.mxu0 0.0
        %787 = vmatpush1.msra.mxu0 %v660
        %788 = vmatprep.subr.mxu0 0.0
        %789 = vmatpush1.msra.mxu0 %v661
        %790 = vmatprep.subr.mxu0 0.0
        %791 = vmatpush1.msra.mxu0 %v662
        %792 = vmatprep.subr.mxu0 0.0
        %793 = vmatpush1.msra.mxu0 %v663
        %794 = vmatprep.subr.mxu0 0.0
        %795 = vmatpush1.msra.mxu0 %v664
        %796 = vmatprep.subr.mxu0 0.0
        %797 = vmatpush1.msra.mxu0 %v665
        %798 = vmatprep.subr.mxu0 0.0
        %799 = vmatpush1.msra.mxu0 %v666
        %800 = vmatprep.subr.mxu0 0.0
        %801 = vmatpush1.msra.mxu0 %v667
        %802 = vmatprep.subr.mxu0 0.0
        %803 = vmatpush1.msra.mxu0 %v668
        %804 = vmatprep.subr.mxu0 0.0
        %805 = vmatpush1.msra.mxu0 %v669
        %806 = vmatprep.subr.mxu0 0.0
        %807 = vmatpush1.msra.mxu0 %v670
        %808 = vmatprep.subr.mxu0 0.0
        %809 = vmatpush1.msra.mxu0 %v671
        %810 = vmatprep.subr.mxu0 0.0
        %811 = vmatpush1.msra.mxu0 %v672
        %812 = vmatprep.mubr.f32.mxu0 %v602
        %813 = vmatmul.mubr.f32.gmra.mrb[0].mxu0 %v601
        %v814 = vpop.f32.mrb[0].mxu0
        %v815 = vadd.f32 %v740, %v814
        %v816 = vpop.f32.mrb[0].mxu0
        %817 = vmatprep.mubr.f32.mxu0 %v606
        %818 = vmatmul.mubr.f32.gmra.mrb[0].mxu0 %v605
        %v819 = vpop.f32.mrb[0].mxu0
        %v820 = vadd.f32 %v745, %v819
        %v821 = vpop.f32.mrb[0].mxu0
        %822 = vdwg.mxu0
        %v823 = vadd.f32 %v607, %v815
        %v824 = vadd.f32 %v608, %v820
        %825 = vst [vmem:[#allocation2] sm:$0xff] %v823
        %826 = vst [vmem:[#allocation2 + $0x8] sm:$0xff] %v824
        %p827 = scmp.eq.s32.totalorder %s29, 1
        // Predicated region
        $region61: #{tpu_custom_call.1} parent=39 // pred_check
          %p828 = pneg %p827
        $region62: #{tpu_custom_call.1} parent=39 // pred_check_branch
          %830 = sbr.rel (%p828) target = $region64
        $region63: #{tpu_custom_call.1} parent=39 // pred_region
          %v831 = vld [vmem:[#allocation2] sm:$0xff]
          %v832 = vld [vmem:[#allocation2 + $0x8] sm:$0xff]
          %v833 = vld [vmem:[%s4] sm:$0x1]
          %v835 = vlaneseq
          %v836 = vshrl.u32 %v835, 7
          %v837 = vsub.s32 0, %v836
          %v838 = vrot.slane %v833, %v837
          %v840 = vadd.f32 %v831, %v838
          %v841 = vadd.f32 %v832, %v838
          %842 = vst [vmem:[#allocation11] sm:$0xff] %v840
          %843 = vst [vmem:[#allocation11 + $0x8] sm:$0xff] %v841
        $region64: #{tpu_custom_call.1} parent=39 // pred_fallthru
          _
        // Predicated region
        $region65: #{tpu_custom_call.1} parent=39 // pred_check
          %p844 = pneg %p179
        $region66: #{tpu_custom_call.1} parent=39 // pred_check_branch
          %846 = sbr.rel (%p844) target = $region68
        $region67: #{tpu_custom_call.1} parent=39 // pred_region
          %s847 = smul.u32 2, %s28
          %s849 = ssub.s32 256, 256
          %850 = vsyncadd [#allocation5], %s849
          %s851 = smul.addr %s847, 128
          %s852 = scalar_lea.hbm %s5, %s851
          %s853 = sshll.u32 [#allocation11], 4
          %s854 = int_to_ptr.vmem [resolvable:$true] %s853
          %859 = dma.vmem_to_hbm [thread:$0]  %s854, 256, %s852, [#allocation5], 128, 128, 8
        $region68: #{tpu_custom_call.1} parent=39 // pred_fallthru
          _
        // Predicated region
        $region69: #{tpu_custom_call.1} parent=39 // pred_check
          %p860 = pneg %p179
        $region70: #{tpu_custom_call.1} parent=39 // pred_check_branch
          %862 = sbr.rel (%p860) target = $region72
        $region71: #{tpu_custom_call.1} parent=39 // pred_region
          %863 = dma.done [#allocation5], 256
        $region72: #{tpu_custom_call.1} parent=39 // pred_fallthru
          _
      $region40: #{tpu_custom_call.1} parent=5 // pred_fallthru
        _
      %p864 = scmp.le.s32.totalorder 2, %s19
      // Predicated region
      $region73: #{tpu_custom_call.1} parent=5 // pred_check
        %p865 = pneg %p864
      $region74: #{tpu_custom_call.1} parent=5 // pred_check_branch
        %867 = sbr.rel (%p865) target = $region76
      $region75: #{tpu_custom_call.1} parent=5 // pred_region
        %s868 = ssub.s32 %s19, 2
      $region76: #{tpu_custom_call.1} parent=5 // pred_fallthru
        _
    $region6: #{tpu_custom_call.1} parent=1 // loop_footer
      %s23 = sadd.s32 1, %s19
    $region7: #{tpu_custom_call.1} parent=1 // loop_footer_branch
      %18 = sbr.rel target = $region3
    $region8: #{tpu_custom_call.1} parent=1 // loop_exit
      _
    %869 = vsyncpa [#allocation4], 1
    %s870 = scalar_lea.sflag [#allocation4], 1
    %871 = vsyncpa %s870, 1
    %872 = vsyncpa [#allocation7], 1
    %s873 = scalar_lea.sflag [#allocation7], 1
    %874 = vsyncpa %s873, 1
    %875 = vsyncpa [#allocation10], 1
    %s876 = scalar_lea.sflag [#allocation10], 1
    %877 = vsyncpa %s876, 1
    %878 = vsyncpa [#allocation5], 1
    %s879 = scalar_lea.sflag [#allocation5], 1
    %880 = vsyncpa %s879, 1

</llo_original>
